<compile_context>
chip_gen: v6e
topology: v6e:2x2x1
jax: 0.10.0
libtpu: 0.0.40
codegen_flags: <defaults>
</compile_context>

<pallas_src>
import jax
import jax.numpy as jnp
from jax.experimental import pallas as pl
from jax.experimental.pallas import tpu as pltpu

# ---------------- model hyper-params (from the module __init__) -------------
EMBEDDING_DIM = 64                   # config['embedding_dim']
HALF_DIM = EMBEDDING_DIM // 2        # each encoder emits embedding_dim // 2
RESNET_FEAT = 512                    # resnet18 fc.in_features
TEXT_HIDDEN = 384                    # MiniLM-L12-v2 hidden_size
OUT_PAD = 128                        # lane-dense padded output width
NORMALIZE = True                     # config['normalize_embedding']
USE_TEXT = True                      # config['use_text']


# ---------------------------- Pallas kernel ---------------------------------
def embedding_kernel(img_feat_ref, tok_ref, mask_ref, w_img_ref, w_txt_ref,
                     out_ref):
    """Fused head: two MXU dots + deferred mean-pool divide + rsqrt L2 norm.

    img_feat_ref : (tb, 512)     bf16  ResNet18 pooled features
    tok_ref      : (tb, S, 384)  bf16  MiniLM last_hidden_state (model_output[0])
    mask_ref     : (tb, S)       f32   attention mask
    w_img_ref    : (512, 128)    bf16  ImageEncoder fc, lanes [0,32) valid
    w_txt_ref    : (384, 128)    bf16  TextEncoder fc_embed, lanes [32,64) valid
    out_ref      : (tb, 128)     f32   lane-dense padded normalized embedding
    """
    mask = mask_ref[...]                                        # (tb, S)

    # TextEncoder._mean_pooling numerator (divide deferred past the matmul).
    # v5e has no bf16 VALU: upcast the bf16 token stream to f32 before the
    # mask-multiply; the HBM stream stays bf16 (that's the bandwidth win).
    tok = tok_ref[...].astype(jnp.float32)                      # (tb, S, 384)
    masked_sum = jnp.sum(tok * mask[:, :, None], axis=1)        # (tb, 384)

    # Two accumulating MXU matmuls against lane-padded bf16 weight blocks
    # (no (tb, 896) concat temporary; the zero-column MXU work is free since
    # the MXU is otherwise idle).  bf16 operands, f32 accumulation.
    fused = jnp.dot(img_feat_ref[...], w_img_ref[...],
                    preferred_element_type=jnp.float32)         # (tb, 128)
    fused = fused + jnp.dot(masked_sum.astype(jnp.bfloat16), w_txt_ref[...],
                            preferred_element_type=jnp.float32)

    # Deferred mean-pool divide: exact reciprocal on the tiny (tb, 1) denom
    # (fidelity to torch.sum(...)/torch.clamp(mask.sum(1), min=1e-9)); scale
    # only the text lanes (>= HALF_DIM).  Padded lanes are exactly zero.
    denom = jnp.maximum(jnp.sum(mask, axis=1, keepdims=True), 1e-9)   # (tb, 1)
    inv_denom = pl.reciprocal(denom, approx=False)                    # exact
    lane = jax.lax.broadcasted_iota(jnp.int32, fused.shape, 1)        # (tb, 128)
    embed = fused * jnp.where(lane < HALF_DIM, 1.0, inv_denom)

    # F.normalize(p=2, dim=1, eps=1e-12) via EUP rsqrt; padded lanes are zero
    # so the 128-lane sum of squares equals the 64-lane one.  Clamp sum-of-
    # squares at eps^2 = 1e-24 to preserve x / max(||x||, 1e-12) semantics.
    if NORMALIZE:
        sumsq = jnp.sum(embed * embed, axis=1, keepdims=True)
        embed = embed * jax.lax.rsqrt(jnp.maximum(sumsq, 1e-24))

    out_ref[...] = embed.astype(out_ref.dtype)


# ------------------------------- wrapper -------------------------------------
def _pad_weights(w_img, w_txt):
    """Lane-pad the two fc heads to 128-wide bf16 blocks.

    w_img (512, 32) -> (512, 128), valid lanes [0, 32)
    w_txt (384, 32) -> (384, 128), valid lanes [32, 64)
    Zero columns elsewhere keep the fused output lane-dense and make the
    padded lanes of the result exactly zero.
    """
    w_i = jnp.zeros((RESNET_FEAT, OUT_PAD), jnp.float32)
    w_i = w_i.at[:, :HALF_DIM].set(w_img)
    w_t = jnp.zeros((TEXT_HIDDEN, OUT_PAD), jnp.float32)
    w_t = w_t.at[:, HALF_DIM:EMBEDDING_DIM].set(w_txt)
    return w_i.astype(jnp.bfloat16), w_t.astype(jnp.bfloat16)


def _vmem_capacity_bytes():
    """Physical VMEM per TensorCore (128 MiB v5e/v6e, 64 MiB v7x)."""
    try:
        info = pltpu.get_tpu_info()
        for name in ("vmem_capacity_bytes", "vmem_size_bytes", "vmem_bytes"):
            v = getattr(info, name, None)
            if v:
                return int(v)
    except Exception:
        pass
    return 64 << 20   # conservative fallback (v7x per-TC VMEM)


def _pick_tile_b(batch, seq_len, tile_budget_bytes):
    """Batch tile: largest multiple of 8 whose DOUBLE-BUFFERED streaming blocks
    fit the budget, capped at ceil(batch/2) so the grid has >= 2 steps and
    v7x's two TensorCores both get work (costs one extra ~0.35us grid step on
    single-TC v5e/v6e)."""
    if batch <= 8:
        return batch  # block dim equal to the full array dim is always legal
    bytes_per_row = (2 * seq_len * TEXT_HIDDEN    # tokens   (bf16)
                     + 2 * RESNET_FEAT            # img feat (bf16)
                     + 4 * seq_len                # mask     (f32)
                     + 4 * OUT_PAD)               # output   (f32)
    max_rows = tile_budget_bytes // (2 * bytes_per_row)   # 2x: double-buffered
    tile = int(min(max_rows, 4096))
    tile = min(tile, pl.cdiv(batch, 2))                   # grid >= 2
    return max(8, (tile // 8) * 8)


def embedding_model_pallas(img_feats, w_img, token_embeds, attention_mask,
                           w_txt):
    B = img_feats.shape[0]
    S = token_embeds.shape[1]

    # Generation-aware scoped-VMEM limit: 64 MiB on v5e/v6e (128 MiB physical,
    # 16/32 MiB default), 32 MiB on v7x (64 MiB physical).  Streaming blocks
    # get ~3/4 of it; resident weights + compiler scratch fit in the rest.
    vmem_cap = _vmem_capacity_bytes()
    vmem_limit = int(min(64 << 20, vmem_cap // 2))
    tile_b = _pick_tile_b(B, S, (vmem_limit * 3) // 4)

    w_img_pad, w_txt_pad = _pad_weights(w_img, w_txt)

    # Halve the dominant HBM streams: bf16 activations.  Mask goes in as f32
    # so the kernel does no int32->f32 VPU conversion.
    img_bf16 = img_feats.astype(jnp.bfloat16)
    tok_bf16 = token_embeds.astype(jnp.bfloat16)
    mask_f32 = attention_mask.astype(jnp.float32)

    grid_spec = pltpu.PrefetchScalarGridSpec(
        num_scalar_prefetch=0,
        grid=(pl.cdiv(B, tile_b),),
        in_specs=[
            pl.BlockSpec((tile_b, RESNET_FEAT), lambda i: (i, 0)),
            pl.BlockSpec((tile_b, S, TEXT_HIDDEN), lambda i: (i, 0, 0)),
            pl.BlockSpec((tile_b, S), lambda i: (i, 0)),
            # weights resident across all grid steps
            pl.BlockSpec((RESNET_FEAT, OUT_PAD), lambda i: (0, 0)),
            pl.BlockSpec((TEXT_HIDDEN, OUT_PAD), lambda i: (0, 0)),
        ],
        out_specs=pl.BlockSpec((tile_b, OUT_PAD), lambda i: (i, 0)),
    )

    out_padded = pl.pallas_call(
        embedding_kernel,
        out_shape=jax.ShapeDtypeStruct((B, OUT_PAD), jnp.float32),
        grid_spec=grid_spec,
        compiler_params=pltpu.CompilerParams(
            # batch axis is independent -> shard across v7x's 2 TensorCores
            dimension_semantics=("parallel",),
            vmem_limit_bytes=vmem_limit,
        ),
    )(img_bf16, tok_bf16, mask_f32, w_img_pad, w_txt_pad)

    # NOTE: when B % tile_b != 0 the trailing block reads padded rows; this is
    # harmless because those output rows never appear in out_padded[:B].
    # drop the lane padding (valid embedding is the first 64 lanes)
    return out_padded[:, :EMBEDDING_DIM]


# ---------------------- plain-JAX glue / backbone stubs ----------------------
def image_backbone_stub(images, w_stub):
    # TODO(synk): pretrained torchvision ResNet18 backbone (conv stack +
    # avgpool) has no in-script equivalent; deterministic linear+relu stub.
    B = images.shape[0]
    return jax.nn.relu(images.reshape(B, -1) @ w_stub)        # (B, 512)


def text_backbone_stub(input_ids, embed_table):
    # TODO(synk): pretrained HF MiniLM-L12-v2 transformer has no in-script
    # equivalent; deterministic embedding-lookup stub.
    return jnp.take(embed_table, input_ids, axis=0)           # (B, S, 384)


def reference_forward(img_feats, w_img, token_embeds, attention_mask, w_txt):
    """Plain-JAX f32 reference of the EmbeddingModel head (for validation)."""
    img_embed = img_feats @ w_img
    mask = attention_mask.astype(jnp.float32)
    summed = jnp.sum(token_embeds * mask[:, :, None], axis=1)
    denom = jnp.maximum(jnp.sum(mask, axis=1, keepdims=True), 1e-9)
    txt_embed = (summed / denom) @ w_txt
    embed = jnp.concatenate([img_embed, txt_embed], axis=1)
    if NORMALIZE:
        norm = jnp.sqrt(jnp.sum(embed * embed, axis=1, keepdims=True))
        embed = embed / jnp.maximum(norm, 1e-12)
    return embed


# ----------------------------------- main ------------------------------------
if __name__ == "__main__":
    key = jax.random.PRNGKey(0)
    (k_img, k_ids, k_wstub, k_wimg, k_tab, k_wtxt) = jax.random.split(key, 6)

    # small shapes
    B, C, HW, S, VOCAB = 2, 3, 32, 8, 100

    # inputs (NCHW images, token ids, attention mask)
    images = jax.random.normal(k_img, (B, C, HW, HW), dtype=jnp.float32)
    input_ids = jax.random.randint(k_ids, (B, S), 0, VOCAB, dtype=jnp.int32)
    attention_mask = jnp.array([[1, 1, 1, 1, 1, 0, 0, 0],
                                [1, 1, 1, 1, 1, 1, 1, 1]], dtype=jnp.int32)

    # deterministic parameters
    w_img_backbone = (jax.random.normal(k_wstub, (C * HW * HW, RESNET_FEAT),
                                        dtype=jnp.float32)
                      * (C * HW * HW) ** -0.5)
    w_img_fc = (jax.random.normal(k_wimg, (RESNET_FEAT, HALF_DIM),
                                  dtype=jnp.float32) * RESNET_FEAT ** -0.5)
    token_table = (jax.random.normal(k_tab, (VOCAB, TEXT_HIDDEN),
                                     dtype=jnp.float32) * 0.02)
    w_txt_fc = (jax.random.normal(k_wtxt, (TEXT_HIDDEN, HALF_DIM),
                                  dtype=jnp.float32) * TEXT_HIDDEN ** -0.5)

    # backbone stubs (plain-JAX glue)
    img_feats = image_backbone_stub(images, w_img_backbone)     # (B, 512)
    token_embeds = text_backbone_stub(input_ids, token_table)   # (B, S, 384)

    # fused Pallas kernel: fc heads + mean pooling + concat + L2 norm
    embed = embedding_model_pallas(img_feats, w_img_fc, token_embeds,
                                   attention_mask, w_txt_fc)
    embed = jax.block_until_ready(embed)

    # validate against the plain-JAX f32 reference (bf16 inputs/MXU -> loose tol)
    ref = reference_forward(img_feats, w_img_fc, token_embeds, attention_mask,
                            w_txt_fc)

    assert embed.shape == (B, EMBEDDING_DIM)
    assert bool(jnp.all(jnp.isfinite(embed)))
    norms = jnp.sqrt(jnp.sum(embed * embed, axis=1))
    assert bool(jnp.allclose(norms, 1.0, atol=1e-3))
    assert bool(jnp.allclose(embed, ref, atol=5e-2, rtol=5e-2))

    print("KERNEL_OK")
</pallas_src>

<mosaic_0001>
module attributes {stable_mosaic.version = 11 : i64} {
  func.func @embedding_kernel(%arg0: i32, %arg1: memref<2x512xbf16, #tpu.memory_space<vmem>>, %arg2: memref<2x8x384xbf16, #tpu.memory_space<vmem>>, %arg3: memref<2x8xf32, #tpu.memory_space<vmem>>, %arg4: memref<512x128xbf16, #tpu.memory_space<vmem>>, %arg5: memref<384x128xbf16, #tpu.memory_space<vmem>>, %arg6: memref<2x128xf32, #tpu.memory_space<vmem>>) attributes {dimension_semantics = [#tpu.dimension_semantics<parallel>], iteration_bounds = array<i64: 1>, scalar_prefetch = 0 : i64, scratch_operands = 0 : i64, tpu.core_type = #tpu.core_type<tc>, window_params = [{transform_indices = @transform_0, window_bounds = array<i64: 2, 512>}, {transform_indices = @transform_1, window_bounds = array<i64: 2, 8, 384>}, {transform_indices = @transform_2, window_bounds = array<i64: 2, 8>}, {pipeline_mode = #tpu.pipeline_mode<synchronous>, transform_indices = @transform_3, window_bounds = array<i64: 512, 128>}, {pipeline_mode = #tpu.pipeline_mode<synchronous>, transform_indices = @transform_4, window_bounds = array<i64: 384, 128>}, {transform_indices = @transform_5, window_bounds = array<i64: 2, 128>}]} {
    %c0 = arith.constant 0 : index
    %c0_0 = arith.constant 0 : index
    %0 = vector.load %arg3[%c0, %c0_0] : memref<2x8xf32, #tpu.memory_space<vmem>>, vector<2x8xf32>
    %c0_1 = arith.constant 0 : index
    %c0_2 = arith.constant 0 : index
    %c0_3 = arith.constant 0 : index
    %1 = vector.load %arg2[%c0_1, %c0_2, %c0_3] : memref<2x8x384xbf16, #tpu.memory_space<vmem>>, vector<2x8x384xbf16>
    %2 = arith.extf %1 : vector<2x8x384xbf16> to vector<2x8x384xf32>
    %3 = vector.shape_cast %0 : vector<2x8xf32> to vector<2x8x1xf32>
    %4 = vector.broadcast %3 : vector<2x8x1xf32> to vector<2x8x384xf32>
    %5 = arith.mulf %2, %4 : vector<2x8x384xf32>
    %cst = arith.constant dense<0.000000e+00> : vector<2x384xf32>
    %6 = vector.multi_reduction <add>, %5, %cst [1] : vector<2x8x384xf32> to vector<2x384xf32>
    %c0_4 = arith.constant 0 : index
    %c0_5 = arith.constant 0 : index
    %7 = vector.load %arg1[%c0_4, %c0_5] : memref<2x512xbf16, #tpu.memory_space<vmem>>, vector<2x512xbf16>
    %c0_6 = arith.constant 0 : index
    %c0_7 = arith.constant 0 : index
    %8 = vector.load %arg4[%c0_6, %c0_7] : memref<512x128xbf16, #tpu.memory_space<vmem>>, vector<512x128xbf16>
    %cst_8 = arith.constant dense<0.000000e+00> : vector<2x128xf32>
    %9 = tpu.matmul %7, %8, %cst_8 {dimension_numbers = #tpu.dot_dimension_numbers<[1], [0], [0], [1], [0, 0, 1, 1], [], []>} : vector<2x512xbf16>, vector<512x128xbf16>, vector<2x128xf32> -> vector<2x128xf32>
    %10 = arith.truncf %6 : vector<2x384xf32> to vector<2x384xbf16>
    %c0_9 = arith.constant 0 : index
    %c0_10 = arith.constant 0 : index
    %11 = vector.load %arg5[%c0_9, %c0_10] : memref<384x128xbf16, #tpu.memory_space<vmem>>, vector<384x128xbf16>
    %cst_11 = arith.constant dense<0.000000e+00> : vector<2x128xf32>
    %12 = tpu.matmul %10, %11, %cst_11 {dimension_numbers = #tpu.dot_dimension_numbers<[1], [0], [0], [1], [0, 0, 1, 1], [], []>} : vector<2x384xbf16>, vector<384x128xbf16>, vector<2x128xf32> -> vector<2x128xf32>
    %13 = arith.addf %9, %12 : vector<2x128xf32>
    %cst_12 = arith.constant dense<0.000000e+00> : vector<2xf32>
    %14 = vector.multi_reduction <add>, %0, %cst_12 [1] : vector<2x8xf32> to vector<2xf32>
    %15 = vector.shape_cast %14 : vector<2xf32> to vector<2x1xf32>
    %cst_13 = arith.constant 9.99999971E-10 : f32
    %16 = vector.broadcast %cst_13 : f32 to vector<2x1xf32>
    %17 = arith.maximumf %15, %16 : vector<2x1xf32>
    %18 = tpu.reciprocal %17 : vector<2x1xf32> -> vector<2x1xf32>
    %19 = tpu.iota {dimensions = array<i32: 1>} : vector<2x128xi32>
    %c32_i32 = arith.constant 32 : i32
    %20 = vector.broadcast %c32_i32 : i32 to vector<2x128xi32>
    %21 = arith.cmpi slt, %19, %20 : vector<2x128xi32>
    %cst_14 = arith.constant 1.000000e+00 : f32
    %22 = vector.broadcast %cst_14 : f32 to vector<2x128xf32>
    %23 = vector.shape_cast %18 : vector<2x1xf32> to vector<2x1xf32>
    %24 = vector.broadcast %23 : vector<2x1xf32> to vector<2x128xf32>
    %25 = arith.select %21, %22, %24 : vector<2x128xi1>, vector<2x128xf32>
    %26 = arith.mulf %13, %25 : vector<2x128xf32>
    %27 = arith.mulf %26, %26 : vector<2x128xf32>
    %cst_15 = arith.constant dense<0.000000e+00> : vector<2xf32>
    %28 = vector.multi_reduction <add>, %27, %cst_15 [1] : vector<2x128xf32> to vector<2xf32>
    %29 = vector.shape_cast %28 : vector<2xf32> to vector<2x1xf32>
    %cst_16 = arith.constant 1.000000e-24 : f32
    %30 = vector.broadcast %cst_16 : f32 to vector<2x1xf32>
    %31 = arith.maximumf %29, %30 : vector<2x1xf32>
    %32 = math.rsqrt %31 : vector<2x1xf32>
    %33 = vector.broadcast %32 : vector<2x1xf32> to vector<2x128xf32>
    %34 = arith.mulf %26, %33 : vector<2x128xf32>
    %c0_17 = arith.constant 0 : index
    %c0_18 = arith.constant 0 : index
    %35 = vector.load %arg6[%c0_17, %c0_18] : memref<2x128xf32, #tpu.memory_space<vmem>>, vector<2x128xf32>
    tpu.vector_store %arg6[%c0_17, %c0_18], %34 {strides = array<i32>} : memref<2x128xf32, #tpu.memory_space<vmem>>, vector<2x128xf32>,
    return
  }
  func.func @transform_0(%arg0: i32) -> (i32, i32) {
    %c0_i32 = arith.constant 0 : i32
    %c0_i32_0 = arith.constant 0 : i32
    return %arg0, %c0_i32 : i32, i32
  }
  func.func @transform_1(%arg0: i32) -> (i32, i32, i32) {
    %c0_i32 = arith.constant 0 : i32
    %c0_i32_0 = arith.constant 0 : i32
    %c0_i32_1 = arith.constant 0 : i32
    return %arg0, %c0_i32, %c0_i32_0 : i32, i32, i32
  }
  func.func @transform_2(%arg0: i32) -> (i32, i32) {
    %c0_i32 = arith.constant 0 : i32
    %c0_i32_0 = arith.constant 0 : i32
    return %arg0, %c0_i32 : i32, i32
  }
  func.func @transform_3(%arg0: i32) -> (i32, i32) {
    %c0_i32 = arith.constant 0 : i32
    %c0_i32_0 = arith.constant 0 : i32
    %c0_i32_1 = arith.constant 0 : i32
    return %c0_i32, %c0_i32_0 : i32, i32
  }
  func.func @transform_4(%arg0: i32) -> (i32, i32) {
    %c0_i32 = arith.constant 0 : i32
    %c0_i32_0 = arith.constant 0 : i32
    %c0_i32_1 = arith.constant 0 : i32
    return %c0_i32, %c0_i32_0 : i32, i32
  }
  func.func @transform_5(%arg0: i32) -> (i32, i32) {
    %c0_i32 = arith.constant 0 : i32
    %c0_i32_0 = arith.constant 0 : i32
    return %arg0, %c0_i32 : i32, i32
  }
}

</mosaic_0001>

<llo_original>
// kernel: tpu_custom_call.1
$region0: #{tpu_custom_call.1}
  #allocation0 [shape = 'u32[]', space=smem, size = 0x4, offset = 0x4, fixed_abs, tag = 'smem constant byte address 0x4 - core index']
  #allocation1 [shape = 'u32[144,128]{1,0:T(1,128)}', space=vmem, size = 0x12000, scoped, tag = 'internal scratch']
  %s0 = inlined_call_operand.hbm [shape: bf16[2,512], index: 0, kind: input, shape index: {}]
  %s1 = inlined_call_operand.hbm [shape: bf16[2,8,384], index: 1, kind: input, shape index: {}]
  %s2 = inlined_call_operand.vmem [shape: f32[2,8], index: 2, kind: input, shape index: {}]
  %s3 = inlined_call_operand.hbm [shape: bf16[512,128], index: 3, kind: input, shape index: {}]
  %s4 = inlined_call_operand.hbm [shape: bf16[384,128], index: 4, kind: input, shape index: {}]
  %s5 = inlined_call_operand.hbm [shape: f32[2,128], index: 5, kind: output, shape index: {}]
  %s6 = sld [smem:[#allocation0]]
  $region46: #{tpu_custom_call.1} parent=0
    _
  %s8 = ssub.s32 1, %s6
  %s9 = scalar_select 0, %s8, %s6
  $region1: #{tpu_custom_call.1} parent=0
    #allocation2 [shape = 'u8[2048]{0}', space=vmem, size = 0x800, scoped, tag = 'input window, operand 0, single buffered']
    #allocation3 [shape = 's32[1]{0}', space=sflag, size = 0x4, scoped, tag = 'scoped memory for tpu_custom_call.1']
    #allocation4 [shape = 's32[1]{0}', space=sflag, size = 0x4, scoped, tag = 'scoped memory for tpu_custom_call.1']
    #allocation5 [shape = 'u8[12288]{0}', space=vmem, size = 0x3000, scoped, tag = 'input window, operand 1, single buffered']
    #allocation6 [shape = 's32[1]{0}', space=sflag, size = 0x4, scoped, tag = 'scoped memory for tpu_custom_call.1']
    #allocation7 [shape = 'u8[131072]{0}', space=vmem, size = 0x20000, scoped, tag = 'input window, operand 3, single buffered']
    #allocation8 [shape = 'u8[98304]{0}', space=vmem, size = 0x18000, scoped, tag = 'input window, operand 4, single buffered']
    #allocation9 [shape = 's32[1]{0}', space=sflag, size = 0x4, scoped, tag = 'scoped memory for tpu_custom_call.1']
    #allocation10 [shape = 'u8[1024]{0}', space=vmem, size = 0x400, scoped, tag = 'output window, operand 0, single buffered']
    %10 = vsyncpa [#allocation3], 0
    %11 = vsyncpa [#allocation6], 0
    %12 = vsyncpa [#allocation9], 0
    %13 = vsyncpa [#allocation4], 0
    // Predicated region
    $region2: #{tpu_custom_call.1} parent=1 // pred_check
      _
    $region3: #{tpu_custom_call.1} parent=1 // pred_check_branch
      %15 = sbr.rel (0) target = $region5
    $region4: #{tpu_custom_call.1} parent=1 // pred_region
      %s17 = ssub.s32 64, 64
      %18 = vsyncadd [#allocation3], %s17
      %s20 = sshll.u32 [#allocation2], 4
      %s21 = int_to_ptr.vmem [resolvable:$true] %s20
      %23 = dma.hbm_to_vmem [thread:$0]  %s0, 64, %s21, [#allocation3]
    $region5: #{tpu_custom_call.1} parent=1 // pred_fallthru
      _
    // Predicated region
    $region6: #{tpu_custom_call.1} parent=1 // pred_check
      _
    $region7: #{tpu_custom_call.1} parent=1 // pred_check_branch
      %25 = sbr.rel (0) target = $region9
    $region8: #{tpu_custom_call.1} parent=1 // pred_region
      %s27 = ssub.s32 384, 384
      %28 = vsyncadd [#allocation6], %s27
      %s29 = sshll.u32 [#allocation5], 4
      %s30 = int_to_ptr.vmem [resolvable:$true] %s29
      %35 = dma.hbm_to_vmem [thread:$0]  %s1, 384, %s30, [#allocation6], 192, 192, 12
    $region9: #{tpu_custom_call.1} parent=1 // pred_fallthru
      _
    // Predicated region
    $region10: #{tpu_custom_call.1} parent=1 // pred_check
      _
    $region11: #{tpu_custom_call.1} parent=1 // pred_check_branch
      %37 = sbr.rel (0) target = $region13
    $region12: #{tpu_custom_call.1} parent=1 // pred_region
      _
    $region13: #{tpu_custom_call.1} parent=1 // pred_fallthru
      _
    // Predicated region
    $region14: #{tpu_custom_call.1} parent=1 // pred_check
      _
    $region15: #{tpu_custom_call.1} parent=1 // pred_check_branch
      %39 = sbr.rel (0) target = $region17
    $region16: #{tpu_custom_call.1} parent=1 // pred_region
      %s41 = ssub.s32 4096, 4096
      %42 = vsyncadd [#allocation6], %s41
      %s43 = sshll.u32 [#allocation7], 4
      %s44 = int_to_ptr.vmem [resolvable:$true] %s43
      %49 = dma.hbm_to_vmem [thread:$0]  %s3, 4096, %s44, [#allocation6], 64, 64, 4
    $region17: #{tpu_custom_call.1} parent=1 // pred_fallthru
      _
    // Predicated region
    $region18: #{tpu_custom_call.1} parent=1 // pred_check
      _
    $region19: #{tpu_custom_call.1} parent=1 // pred_check_branch
      %51 = sbr.rel (0) target = $region21
    $region20: #{tpu_custom_call.1} parent=1 // pred_region
      %s53 = ssub.s32 3072, 3072
      %54 = vsyncadd [#allocation9], %s53
      %s55 = sshll.u32 [#allocation8], 4
      %s56 = int_to_ptr.vmem [resolvable:$true] %s55
      %61 = dma.hbm_to_vmem [thread:$0]  %s4, 3072, %s56, [#allocation9], 64, 64, 4
    $region21: #{tpu_custom_call.1} parent=1 // pred_fallthru
      _
    // Predicated region
    $region22: #{tpu_custom_call.1} parent=1 // pred_check
      _
    $region23: #{tpu_custom_call.1} parent=1 // pred_check_branch
      %63 = sbr.rel (0) target = $region25
    $region24: #{tpu_custom_call.1} parent=1 // pred_region
      %64 = dma.done [#allocation3], 64
    $region25: #{tpu_custom_call.1} parent=1 // pred_fallthru
      _
    // Predicated region
    $region26: #{tpu_custom_call.1} parent=1 // pred_check
      _
    $region27: #{tpu_custom_call.1} parent=1 // pred_check_branch
      %66 = sbr.rel (0) target = $region29
    $region28: #{tpu_custom_call.1} parent=1 // pred_region
      %67 = dma.done [#allocation6], 384
    $region29: #{tpu_custom_call.1} parent=1 // pred_fallthru
      _
    // Predicated region
    $region30: #{tpu_custom_call.1} parent=1 // pred_check
      _
    $region31: #{tpu_custom_call.1} parent=1 // pred_check_branch
      %69 = sbr.rel (0) target = $region33
    $region32: #{tpu_custom_call.1} parent=1 // pred_region
      %70 = dma.done [#allocation6], 4096
    $region33: #{tpu_custom_call.1} parent=1 // pred_fallthru
      _
    // Predicated region
    $region34: #{tpu_custom_call.1} parent=1 // pred_check
      _
    $region35: #{tpu_custom_call.1} parent=1 // pred_check_branch
      %72 = sbr.rel (0) target = $region37
    $region36: #{tpu_custom_call.1} parent=1 // pred_region
      %73 = dma.done [#allocation9], 3072
    $region37: #{tpu_custom_call.1} parent=1 // pred_fallthru
      _
    %v75 = vld [vmem:[%s2] sm:$0x3]
    %v76 = vld [vmem:[#allocation5] sm:$0xff]
    %v77 = vld [vmem:[#allocation5 + $0x8] sm:$0xf]
    %v78 = vld [vmem:[#allocation5 + $0xc] sm:$0xff]
    %v79 = vld [vmem:[#allocation5 + $0x14] sm:$0xf]
    %v80 = vunpack.c.l.bf16 %v76
    %v81 = vunpack.c.h.bf16 %v76
    %v82 = vunpack.c.l.bf16 %v77
    %v83 = vunpack.c.l.bf16 %v78
    %v84 = vunpack.c.h.bf16 %v78
    %v85 = vunpack.c.l.bf16 %v79
    %v86 = vlaneseq
    %v87 = vshrl.u32 %v86, 7
    %v88 = vsub.s32 0, %v87
    %v89 = vrot.slane %v75, %v88
    %91 = vbcast.lane.b32.xlu0 %v89, 256
    %v92 = vpop.permute.xlu0 %91
    %v93 = vlaneseq
    %v94 = vshrl.u32 %v93, 7
    %v95 = vsub.s32 1, %v94
    %v96 = vrot.slane %v75, %v95
    %98 = vbcast.lane.b32.xlu0 %v96, 256
    %v99 = vpop.permute.xlu0 %98
    %v100 = vmul.f32 %v80, %v92
    %v101 = vmul.f32 %v81, %v92
    %v102 = vmul.f32 %v82, %v92
    %v103 = vmul.f32 %v83, %v99
    %v104 = vmul.f32 %v84, %v99
    %v105 = vmul.f32 %v85, %v99
    %v106 = vrot.slane %v100, 4
    %v107 = vadd.f32 %v100, %v106
    %v108 = vrot.slane %v107, 2
    %v109 = vadd.f32 %v107, %v108
    %v110 = vrot.slane %v109, 1
    %v111 = vadd.f32 %v109, %v110
    %v112 = vrot.slane %v101, 4
    %v113 = vadd.f32 %v101, %v112
    %v114 = vrot.slane %v113, 2
    %v115 = vadd.f32 %v113, %v114
    %v116 = vrot.slane %v115, 1
    %v117 = vadd.f32 %v115, %v116
    %v118 = vrot.slane %v102, 4
    %v119 = vadd.f32 %v102, %v118
    %v120 = vrot.slane %v119, 2
    %v121 = vadd.f32 %v119, %v120
    %v122 = vrot.slane %v121, 1
    %v123 = vadd.f32 %v121, %v122
    %v124 = vrot.slane %v103, 4
    %v125 = vadd.f32 %v103, %v124
    %v126 = vrot.slane %v125, 2
    %v127 = vadd.f32 %v125, %v126
    %v128 = vrot.slane %v127, 1
    %v129 = vadd.f32 %v127, %v128
    %v130 = vrot.slane %v104, 4
    %v131 = vadd.f32 %v104, %v130
    %v132 = vrot.slane %v131, 2
    %v133 = vadd.f32 %v131, %v132
    %v134 = vrot.slane %v133, 1
    %v135 = vadd.f32 %v133, %v134
    %v136 = vrot.slane %v105, 4
    %v137 = vadd.f32 %v105, %v136
    %v138 = vrot.slane %v137, 2
    %v139 = vadd.f32 %v137, %v138
    %v140 = vrot.slane %v139, 1
    %v141 = vadd.f32 %v139, %v140
    %v142 = vld [vmem:[#allocation2] sm:$0xf]
    %v143 = vld [vmem:[#allocation7] sm:$0xf]
    %v144 = vld [vmem:[#allocation7 + $0x4] sm:$0xf]
    %v145 = vld [vmem:[#allocation7 + $0x8] sm:$0xf]
    %v146 = vld [vmem:[#allocation7 + $0xc] sm:$0xf]
    %v147 = vld [vmem:[#allocation7 + $0x10] sm:$0xf]
    %v148 = vld [vmem:[#allocation7 + $0x14] sm:$0xf]
    %v149 = vld [vmem:[#allocation7 + $0x18] sm:$0xf]
    %v150 = vld [vmem:[#allocation7 + $0x1c] sm:$0xf]
    %v151 = vld [vmem:[#allocation7 + $0x20] sm:$0xf]
    %v152 = vld [vmem:[#allocation7 + $0x24] sm:$0xf]
    %v153 = vld [vmem:[#allocation7 + $0x28] sm:$0xf]
    %v154 = vld [vmem:[#allocation7 + $0x2c] sm:$0xf]
    %v155 = vld [vmem:[#allocation7 + $0x30] sm:$0xf]
    %v156 = vld [vmem:[#allocation7 + $0x34] sm:$0xf]
    %v157 = vld [vmem:[#allocation7 + $0x38] sm:$0xf]
    %v158 = vld [vmem:[#allocation7 + $0x3c] sm:$0xf]
    %v159 = vld [vmem:[#allocation7 + $0x40] sm:$0xf]
    %v160 = vld [vmem:[#allocation7 + $0x44] sm:$0xf]
    %v161 = vld [vmem:[#allocation7 + $0x48] sm:$0xf]
    %v162 = vld [vmem:[#allocation7 + $0x4c] sm:$0xf]
    %v163 = vld [vmem:[#allocation7 + $0x50] sm:$0xf]
    %v164 = vld [vmem:[#allocation7 + $0x54] sm:$0xf]
    %v165 = vld [vmem:[#allocation7 + $0x58] sm:$0xf]
    %v166 = vld [vmem:[#allocation7 + $0x5c] sm:$0xf]
    %v167 = vld [vmem:[#allocation7 + $0x60] sm:$0xf]
    %v168 = vld [vmem:[#allocation7 + $0x64] sm:$0xf]
    %v169 = vld [vmem:[#allocation7 + $0x68] sm:$0xf]
    %v170 = vld [vmem:[#allocation7 + $0x6c] sm:$0xf]
    %v171 = vld [vmem:[#allocation7 + $0x70] sm:$0xf]
    %v172 = vld [vmem:[#allocation7 + $0x74] sm:$0xf]
    %v173 = vld [vmem:[#allocation7 + $0x78] sm:$0xf]
    %v174 = vld [vmem:[#allocation7 + $0x7c] sm:$0xf]
    %v175 = vld [vmem:[#allocation7 + $0x80] sm:$0xf]
    %v176 = vld [vmem:[#allocation7 + $0x84] sm:$0xf]
    %v177 = vld [vmem:[#allocation7 + $0x88] sm:$0xf]
    %v178 = vld [vmem:[#allocation7 + $0x8c] sm:$0xf]
    %v179 = vld [vmem:[#allocation7 + $0x90] sm:$0xf]
    %v180 = vld [vmem:[#allocation7 + $0x94] sm:$0xf]
    %v181 = vld [vmem:[#allocation7 + $0x98] sm:$0xf]
    %v182 = vld [vmem:[#allocation7 + $0x9c] sm:$0xf]
    %v183 = vld [vmem:[#allocation7 + $0xa0] sm:$0xf]
    %v184 = vld [vmem:[#allocation7 + $0xa4] sm:$0xf]
    %v185 = vld [vmem:[#allocation7 + $0xa8] sm:$0xf]
    %v186 = vld [vmem:[#allocation7 + $0xac] sm:$0xf]
    %v187 = vld [vmem:[#allocation7 + $0xb0] sm:$0xf]
    %v188 = vld [vmem:[#allocation7 + $0xb4] sm:$0xf]
    %v189 = vld [vmem:[#allocation7 + $0xb8] sm:$0xf]
    %v190 = vld [vmem:[#allocation7 + $0xbc] sm:$0xf]
    %v191 = vld [vmem:[#allocation7 + $0xc0] sm:$0xf]
    %v192 = vld [vmem:[#allocation7 + $0xc4] sm:$0xf]
    %v193 = vld [vmem:[#allocation7 + $0xc8] sm:$0xf]
    %v194 = vld [vmem:[#allocation7 + $0xcc] sm:$0xf]
    %v195 = vld [vmem:[#allocation7 + $0xd0] sm:$0xf]
    %v196 = vld [vmem:[#allocation7 + $0xd4] sm:$0xf]
    %v197 = vld [vmem:[#allocation7 + $0xd8] sm:$0xf]
    %v198 = vld [vmem:[#allocation7 + $0xdc] sm:$0xf]
    %v199 = vld [vmem:[#allocation7 + $0xe0] sm:$0xf]
    %v200 = vld [vmem:[#allocation7 + $0xe4] sm:$0xf]
    %v201 = vld [vmem:[#allocation7 + $0xe8] sm:$0xf]
    %v202 = vld [vmem:[#allocation7 + $0xec] sm:$0xf]
    %v203 = vld [vmem:[#allocation7 + $0xf0] sm:$0xf]
    %v204 = vld [vmem:[#allocation7 + $0xf4] sm:$0xf]
    %v205 = vld [vmem:[#allocation7 + $0xf8] sm:$0xf]
    %v206 = vld [vmem:[#allocation7 + $0xfc] sm:$0xf]
    %v207 = vpack.c.bf16 %v111, %v111
    %v208 = vpack.c.bf16 %v117, %v117
    %v209 = vpack.c.bf16 %v123, %v123
    %v210 = vpack.c.bf16 %v129, %v129
    %v211 = vpack.c.bf16 %v135, %v135
    %v212 = vpack.c.bf16 %v141, %v141
    %v213 = vld [vmem:[#allocation8] sm:$0xf]
    %v214 = vld [vmem:[#allocation8 + $0x4] sm:$0xf]
    %v215 = vld [vmem:[#allocation8 + $0x8] sm:$0xf]
    %v216 = vld [vmem:[#allocation8 + $0xc] sm:$0xf]
    %v217 = vld [vmem:[#allocation8 + $0x10] sm:$0xf]
    %v218 = vld [vmem:[#allocation8 + $0x14] sm:$0xf]
    %v219 = vld [vmem:[#allocation8 + $0x18] sm:$0xf]
    %v220 = vld [vmem:[#allocation8 + $0x1c] sm:$0xf]
    %v221 = vld [vmem:[#allocation8 + $0x20] sm:$0xf]
    %v222 = vld [vmem:[#allocation8 + $0x24] sm:$0xf]
    %v223 = vld [vmem:[#allocation8 + $0x28] sm:$0xf]
    %v224 = vld [vmem:[#allocation8 + $0x2c] sm:$0xf]
    %v225 = vld [vmem:[#allocation8 + $0x30] sm:$0xf]
    %v226 = vld [vmem:[#allocation8 + $0x34] sm:$0xf]
    %v227 = vld [vmem:[#allocation8 + $0x38] sm:$0xf]
    %v228 = vld [vmem:[#allocation8 + $0x3c] sm:$0xf]
    %v229 = vld [vmem:[#allocation8 + $0x40] sm:$0xf]
    %v230 = vld [vmem:[#allocation8 + $0x44] sm:$0xf]
    %v231 = vld [vmem:[#allocation8 + $0x48] sm:$0xf]
    %v232 = vld [vmem:[#allocation8 + $0x4c] sm:$0xf]
    %v233 = vld [vmem:[#allocation8 + $0x50] sm:$0xf]
    %v234 = vld [vmem:[#allocation8 + $0x54] sm:$0xf]
    %v235 = vld [vmem:[#allocation8 + $0x58] sm:$0xf]
    %v236 = vld [vmem:[#allocation8 + $0x5c] sm:$0xf]
    %v237 = vld [vmem:[#allocation8 + $0x60] sm:$0xf]
    %v238 = vld [vmem:[#allocation8 + $0x64] sm:$0xf]
    %v239 = vld [vmem:[#allocation8 + $0x68] sm:$0xf]
    %v240 = vld [vmem:[#allocation8 + $0x6c] sm:$0xf]
    %v241 = vld [vmem:[#allocation8 + $0x70] sm:$0xf]
    %v242 = vld [vmem:[#allocation8 + $0x74] sm:$0xf]
    %v243 = vld [vmem:[#allocation8 + $0x78] sm:$0xf]
    %v244 = vld [vmem:[#allocation8 + $0x7c] sm:$0xf]
    %v245 = vld [vmem:[#allocation8 + $0x80] sm:$0xf]
    %v246 = vld [vmem:[#allocation8 + $0x84] sm:$0xf]
    %v247 = vld [vmem:[#allocation8 + $0x88] sm:$0xf]
    %v248 = vld [vmem:[#allocation8 + $0x8c] sm:$0xf]
    %v249 = vld [vmem:[#allocation8 + $0x90] sm:$0xf]
    %v250 = vld [vmem:[#allocation8 + $0x94] sm:$0xf]
    %v251 = vld [vmem:[#allocation8 + $0x98] sm:$0xf]
    %v252 = vld [vmem:[#allocation8 + $0x9c] sm:$0xf]
    %v253 = vld [vmem:[#allocation8 + $0xa0] sm:$0xf]
    %v254 = vld [vmem:[#allocation8 + $0xa4] sm:$0xf]
    %v255 = vld [vmem:[#allocation8 + $0xa8] sm:$0xf]
    %v256 = vld [vmem:[#allocation8 + $0xac] sm:$0xf]
    %v257 = vld [vmem:[#allocation8 + $0xb0] sm:$0xf]
    %v258 = vld [vmem:[#allocation8 + $0xb4] sm:$0xf]
    %v259 = vld [vmem:[#allocation8 + $0xb8] sm:$0xf]
    %v260 = vld [vmem:[#allocation8 + $0xbc] sm:$0xf]
    %v267 = vunpack.c.l.b16 %v207
    %v268 = vunpack.c.l.b16 %v208
    %v269 = vunpack.c.l.b16 %v209
    %v270 = vunpack.c.l.b16 %v210
    %v271 = vunpack.c.l.b16 %v211
    %v272 = vunpack.c.l.b16 %v212
    %vm273 = vcmask 1041409
    %v274 = vsel %vm273, %v270, %v267
    %v275 = vsel %vm273, %v271, %v268
    %v276 = vsel %vm273, %v272, %v269
    %v277 = vpack.c.b16 %v274, %v274
    %v278 = vpack.c.b16 %v275, %v275
    %v279 = vpack.c.b16 %v276, %v276
    %v331 = vunpack.c.l.b16 %v213
    %v332 = vunpack.c.l.b16 %v214
    %v333 = vunpack.c.l.b16 %v215
    %v334 = vunpack.c.l.b16 %v216
    %v335 = vunpack.c.l.b16 %v217
    %v336 = vunpack.c.l.b16 %v218
    %v337 = vunpack.c.l.b16 %v219
    %v338 = vunpack.c.l.b16 %v220
    %v339 = vunpack.c.l.b16 %v221
    %v340 = vunpack.c.l.b16 %v222
    %v341 = vunpack.c.l.b16 %v223
    %v342 = vunpack.c.l.b16 %v224
    %v343 = vunpack.c.l.b16 %v225
    %v344 = vunpack.c.l.b16 %v226
    %v345 = vunpack.c.l.b16 %v227
    %v346 = vunpack.c.l.b16 %v228
    %v347 = vunpack.c.l.b16 %v229
    %v348 = vunpack.c.l.b16 %v230
    %v349 = vunpack.c.l.b16 %v231
    %v350 = vunpack.c.l.b16 %v232
    %v351 = vunpack.c.l.b16 %v233
    %v352 = vunpack.c.l.b16 %v234
    %v353 = vunpack.c.l.b16 %v235
    %v354 = vunpack.c.l.b16 %v236
    %v355 = vunpack.c.l.b16 %v237
    %v356 = vunpack.c.l.b16 %v238
    %v357 = vunpack.c.l.b16 %v239
    %v358 = vunpack.c.l.b16 %v240
    %v359 = vunpack.c.l.b16 %v241
    %v360 = vunpack.c.l.b16 %v242
    %v361 = vunpack.c.l.b16 %v243
    %v362 = vunpack.c.l.b16 %v244
    %v363 = vunpack.c.l.b16 %v245
    %v364 = vunpack.c.l.b16 %v246
    %v365 = vunpack.c.l.b16 %v247
    %v366 = vunpack.c.l.b16 %v248
    %v367 = vunpack.c.l.b16 %v249
    %v368 = vunpack.c.l.b16 %v250
    %v369 = vunpack.c.l.b16 %v251
    %v370 = vunpack.c.l.b16 %v252
    %v371 = vunpack.c.l.b16 %v253
    %v372 = vunpack.c.l.b16 %v254
    %v373 = vunpack.c.l.b16 %v255
    %v374 = vunpack.c.l.b16 %v256
    %v375 = vunpack.c.l.b16 %v257
    %v376 = vunpack.c.l.b16 %v258
    %v377 = vunpack.c.l.b16 %v259
    %v378 = vunpack.c.l.b16 %v260
    %v379 = vpack.c.b16 %v332, %v331
    %v380 = vpack.c.b16 %v334, %v333
    %v381 = vpack.c.b16 %v336, %v335
    %v382 = vpack.c.b16 %v338, %v337
    %v383 = vpack.c.b16 %v340, %v339
    %v384 = vpack.c.b16 %v342, %v341
    %v385 = vpack.c.b16 %v344, %v343
    %v386 = vpack.c.b16 %v346, %v345
    %v387 = vpack.c.b16 %v348, %v347
    %v388 = vpack.c.b16 %v350, %v349
    %v389 = vpack.c.b16 %v352, %v351
    %v390 = vpack.c.b16 %v354, %v353
    %v391 = vpack.c.b16 %v356, %v355
    %v392 = vpack.c.b16 %v358, %v357
    %v393 = vpack.c.b16 %v360, %v359
    %v394 = vpack.c.b16 %v362, %v361
    %v395 = vpack.c.b16 %v364, %v363
    %v396 = vpack.c.b16 %v366, %v365
    %v397 = vpack.c.b16 %v368, %v367
    %v398 = vpack.c.b16 %v370, %v369
    %v399 = vpack.c.b16 %v372, %v371
    %v400 = vpack.c.b16 %v374, %v373
    %v401 = vpack.c.b16 %v376, %v375
    %v402 = vpack.c.b16 %v378, %v377
    %427 = vmatprep.subr.bf16.mxu0 0
    %428 = vmatpush1.bf16.msra.mxu0 %v386
    %429 = vmatprep.subr.bf16.mxu0 0
    %430 = vmatpush1.bf16.msra.mxu0 %v385
    %431 = vmatprep.subr.bf16.mxu0 0
    %432 = vmatpush1.bf16.msra.mxu0 %v384
    %433 = vmatprep.subr.bf16.mxu0 0
    %434 = vmatpush1.bf16.msra.mxu0 %v383
    %435 = vmatprep.subr.bf16.mxu0 0
    %436 = vmatpush1.bf16.msra.mxu0 %v382
    %437 = vmatprep.subr.bf16.mxu0 0
    %438 = vmatpush1.bf16.msra.mxu0 %v381
    %439 = vmatprep.subr.bf16.mxu0 0
    %440 = vmatpush1.bf16.msra.mxu0 %v380
    %441 = vmatprep.subr.bf16.mxu0 0
    %442 = vmatpush1.bf16.msra.mxu0 %v379
    %443 = vmatprep.subr.bf16.mxu0 0
    %444 = vmatpush2.bf16.msra.mxu0 %v394
    %445 = vmatprep.subr.bf16.mxu0 0
    %446 = vmatpush2.bf16.msra.mxu0 %v393
    %447 = vmatprep.subr.bf16.mxu0 0
    %448 = vmatpush2.bf16.msra.mxu0 %v392
    %449 = vmatprep.subr.bf16.mxu0 0
    %450 = vmatpush2.bf16.msra.mxu0 %v391
    %451 = vmatprep.subr.bf16.mxu0 0
    %452 = vmatpush2.bf16.msra.mxu0 %v390
    %453 = vmatprep.subr.bf16.mxu0 0
    %454 = vmatpush2.bf16.msra.mxu0 %v389
    %455 = vmatprep.subr.bf16.mxu0 0
    %456 = vmatpush2.bf16.msra.mxu0 %v388
    %457 = vmatprep.subr.bf16.mxu0 0
    %458 = vmatpush2.bf16.msra.mxu0 %v387
    %459 = vmatprep.mubr.bf16.mxu0 %v278
    %460 = vmatmul.mubr.bf16.gmra.mxu0 %v277
    %v461 = vpop.f32.mrf.mxu0
    %v462 = vadd.f32 0.0, %v461
    %v463 = vpop.f32.mrf.mxu0
    %v464 = vpop.f32.mrf.mxu0
    %v465 = vpop.f32.mrf.mxu0
    %466 = vdwg.mxu0
    %467 = vmatprep.subr.bf16.mxu0 0
    %468 = vmatpush1.bf16.msra.mxu0 %v402
    %469 = vmatprep.subr.bf16.mxu0 0
    %470 = vmatpush1.bf16.msra.mxu0 %v401
    %471 = vmatprep.subr.bf16.mxu0 0
    %472 = vmatpush1.bf16.msra.mxu0 %v400
    %473 = vmatprep.subr.bf16.mxu0 0
    %474 = vmatpush1.bf16.msra.mxu0 %v399
    %475 = vmatprep.subr.bf16.mxu0 0
    %476 = vmatpush1.bf16.msra.mxu0 %v398
    %477 = vmatprep.subr.bf16.mxu0 0
    %478 = vmatpush1.bf16.msra.mxu0 %v397
    %479 = vmatprep.subr.bf16.mxu0 0
    %480 = vmatpush1.bf16.msra.mxu0 %v396
    %481 = vmatprep.subr.bf16.mxu0 0
    %482 = vmatpush1.bf16.msra.mxu0 %v395
    %483 = vmatprep.subr.bf16.mxu0 0
    %484 = vmatpush2.bf16.msra.mxu0 0
    %485 = vmatprep.subr.bf16.mxu0 0
    %486 = vmatpush2.bf16.msra.mxu0 0
    %487 = vmatprep.subr.bf16.mxu0 0
    %488 = vmatpush2.bf16.msra.mxu0 0
    %489 = vmatprep.subr.bf16.mxu0 0
    %490 = vmatpush2.bf16.msra.mxu0 0
    %491 = vmatprep.subr.bf16.mxu0 0
    %492 = vmatpush2.bf16.msra.mxu0 0
    %493 = vmatprep.subr.bf16.mxu0 0
    %494 = vmatpush2.bf16.msra.mxu0 0
    %495 = vmatprep.subr.bf16.mxu0 0
    %496 = vmatpush2.bf16.msra.mxu0 0
    %497 = vmatprep.subr.bf16.mxu0 0
    %498 = vmatpush2.bf16.msra.mxu0 0
    %499 = vmatprep.mubr.bf16.mxu0 0
    %500 = vmatmul.mubr.bf16.gmra.mxu0 %v279
    %v501 = vpop.f32.mrf.mxu0
    %v502 = vadd.f32 %v462, %v501
    %v503 = vpop.f32.mrf.mxu0
    %v504 = vpop.f32.mrf.mxu0
    %v505 = vpop.f32.mrf.mxu0
    %506 = vdwg.mxu0
    %v509 = vunpack.c.l.s4 1966171168
    %v510 = vunpack.c.0.s8 %v509
    %v511 = vlaneseq
    %v512 = vshrl.u32 %v511, 7
    %v513 = vsub.s32 %v510, %v512
    %v514 = vrot.slane %v142, %v513
    %v515 = vcombine.high %v514, %v514
    %v517 = vunpack.c.l.s4 1966171168
    %v518 = vunpack.c.0.s8 %v517
    %v519 = vlaneseq
    %v520 = vshrl.u32 %v519, 7
    %v521 = vsub.s32 %v518, %v520
    %v522 = vrot.slane %v514, %v521
    %v524 = vunpack.c.l.s4 1966171168
    %v525 = vunpack.c.0.s8 %v524
    %v526 = vlaneseq
    %v527 = vshrl.u32 %v526, 7
    %v528 = vsub.s32 %v525, %v527
    %v529 = vrot.slane %v515, %v528
    %v530 = vcombine.high %v522, %v522
    %v531 = vcombine.high %v529, %v529
    %v600 = vunpack.c.l.b16 %v143
    %v601 = vunpack.c.l.b16 %v144
    %v602 = vunpack.c.l.b16 %v145
    %v603 = vunpack.c.l.b16 %v146
    %v604 = vunpack.c.l.b16 %v147
    %v605 = vunpack.c.l.b16 %v148
    %v606 = vunpack.c.l.b16 %v149
    %v607 = vunpack.c.l.b16 %v150
    %v608 = vunpack.c.l.b16 %v151
    %v609 = vunpack.c.l.b16 %v152
    %v610 = vunpack.c.l.b16 %v153
    %v611 = vunpack.c.l.b16 %v154
    %v612 = vunpack.c.l.b16 %v155
    %v613 = vunpack.c.l.b16 %v156
    %v614 = vunpack.c.l.b16 %v157
    %v615 = vunpack.c.l.b16 %v158
    %v616 = vunpack.c.l.b16 %v159
    %v617 = vunpack.c.l.b16 %v160
    %v618 = vunpack.c.l.b16 %v161
    %v619 = vunpack.c.l.b16 %v162
    %v620 = vunpack.c.l.b16 %v163
    %v621 = vunpack.c.l.b16 %v164
    %v622 = vunpack.c.l.b16 %v165
    %v623 = vunpack.c.l.b16 %v166
    %v624 = vunpack.c.l.b16 %v167
    %v625 = vunpack.c.l.b16 %v168
    %v626 = vunpack.c.l.b16 %v169
    %v627 = vunpack.c.l.b16 %v170
    %v628 = vunpack.c.l.b16 %v171
    %v629 = vunpack.c.l.b16 %v172
    %v630 = vunpack.c.l.b16 %v173
    %v631 = vunpack.c.l.b16 %v174
    %v632 = vunpack.c.l.b16 %v175
    %v633 = vunpack.c.l.b16 %v176
    %v634 = vunpack.c.l.b16 %v177
    %v635 = vunpack.c.l.b16 %v178
    %v636 = vunpack.c.l.b16 %v179
    %v637 = vunpack.c.l.b16 %v180
    %v638 = vunpack.c.l.b16 %v181
    %v639 = vunpack.c.l.b16 %v182
    %v640 = vunpack.c.l.b16 %v183
    %v641 = vunpack.c.l.b16 %v184
    %v642 = vunpack.c.l.b16 %v185
    %v643 = vunpack.c.l.b16 %v186
    %v644 = vunpack.c.l.b16 %v187
    %v645 = vunpack.c.l.b16 %v188
    %v646 = vunpack.c.l.b16 %v189
    %v647 = vunpack.c.l.b16 %v190
    %v648 = vunpack.c.l.b16 %v191
    %v649 = vunpack.c.l.b16 %v192
    %v650 = vunpack.c.l.b16 %v193
    %v651 = vunpack.c.l.b16 %v194
    %v652 = vunpack.c.l.b16 %v195
    %v653 = vunpack.c.l.b16 %v196
    %v654 = vunpack.c.l.b16 %v197
    %v655 = vunpack.c.l.b16 %v198
    %v656 = vunpack.c.l.b16 %v199
    %v657 = vunpack.c.l.b16 %v200
    %v658 = vunpack.c.l.b16 %v201
    %v659 = vunpack.c.l.b16 %v202
    %v660 = vunpack.c.l.b16 %v203
    %v661 = vunpack.c.l.b16 %v204
    %v662 = vunpack.c.l.b16 %v205
    %v663 = vunpack.c.l.b16 %v206
    %v664 = vpack.c.b16 %v601, %v600
    %v665 = vpack.c.b16 %v603, %v602
    %v666 = vpack.c.b16 %v605, %v604
    %v667 = vpack.c.b16 %v607, %v606
    %v668 = vpack.c.b16 %v609, %v608
    %v669 = vpack.c.b16 %v611, %v610
    %v670 = vpack.c.b16 %v613, %v612
    %v671 = vpack.c.b16 %v615, %v614
    %v672 = vpack.c.b16 %v617, %v616
    %v673 = vpack.c.b16 %v619, %v618
    %v674 = vpack.c.b16 %v621, %v620
    %v675 = vpack.c.b16 %v623, %v622
    %v676 = vpack.c.b16 %v625, %v624
    %v677 = vpack.c.b16 %v627, %v626
    %v678 = vpack.c.b16 %v629, %v628
    %v679 = vpack.c.b16 %v631, %v630
    %v680 = vpack.c.b16 %v633, %v632
    %v681 = vpack.c.b16 %v635, %v634
    %v682 = vpack.c.b16 %v637, %v636
    %v683 = vpack.c.b16 %v639, %v638
    %v684 = vpack.c.b16 %v641, %v640
    %v685 = vpack.c.b16 %v643, %v642
    %v686 = vpack.c.b16 %v645, %v644
    %v687 = vpack.c.b16 %v647, %v646
    %v688 = vpack.c.b16 %v649, %v648
    %v689 = vpack.c.b16 %v651, %v650
    %v690 = vpack.c.b16 %v653, %v652
    %v691 = vpack.c.b16 %v655, %v654
    %v692 = vpack.c.b16 %v657, %v656
    %v693 = vpack.c.b16 %v659, %v658
    %v694 = vpack.c.b16 %v661, %v660
    %v695 = vpack.c.b16 %v663, %v662
    %728 = vmatprep.subr.bf16.mxu0 0
    %729 = vmatpush1.bf16.msra.mxu0 %v671
    %730 = vmatprep.subr.bf16.mxu0 0
    %731 = vmatpush1.bf16.msra.mxu0 %v670
    %732 = vmatprep.subr.bf16.mxu0 0
    %733 = vmatpush1.bf16.msra.mxu0 %v669
    %734 = vmatprep.subr.bf16.mxu0 0
    %735 = vmatpush1.bf16.msra.mxu0 %v668
    %736 = vmatprep.subr.bf16.mxu0 0
    %737 = vmatpush1.bf16.msra.mxu0 %v667
    %738 = vmatprep.subr.bf16.mxu0 0
    %739 = vmatpush1.bf16.msra.mxu0 %v666
    %740 = vmatprep.subr.bf16.mxu0 0
    %741 = vmatpush1.bf16.msra.mxu0 %v665
    %742 = vmatprep.subr.bf16.mxu0 0
    %743 = vmatpush1.bf16.msra.mxu0 %v664
    %744 = vmatprep.subr.bf16.mxu0 0
    %745 = vmatpush2.bf16.msra.mxu0 %v679
    %746 = vmatprep.subr.bf16.mxu0 0
    %747 = vmatpush2.bf16.msra.mxu0 %v678
    %748 = vmatprep.subr.bf16.mxu0 0
    %749 = vmatpush2.bf16.msra.mxu0 %v677
    %750 = vmatprep.subr.bf16.mxu0 0
    %751 = vmatpush2.bf16.msra.mxu0 %v676
    %752 = vmatprep.subr.bf16.mxu0 0
    %753 = vmatpush2.bf16.msra.mxu0 %v675
    %754 = vmatprep.subr.bf16.mxu0 0
    %755 = vmatpush2.bf16.msra.mxu0 %v674
    %756 = vmatprep.subr.bf16.mxu0 0
    %757 = vmatpush2.bf16.msra.mxu0 %v673
    %758 = vmatprep.subr.bf16.mxu0 0
    %759 = vmatpush2.bf16.msra.mxu0 %v672
    %760 = vmatprep.mubr.bf16.mxu0 %v529
    %761 = vmatmul.mubr.bf16.gmra.mxu0 %v522
    %v762 = vpop.f32.mrf.mxu0
    %v763 = vadd.f32 %v502, %v762
    %v764 = vpop.f32.mrf.mxu0
    %v765 = vpop.f32.mrf.mxu0
    %v766 = vpop.f32.mrf.mxu0
    %767 = vdwg.mxu0
    %768 = vmatprep.subr.bf16.mxu0 0
    %769 = vmatpush1.bf16.msra.mxu0 %v687
    %770 = vmatprep.subr.bf16.mxu0 0
    %771 = vmatpush1.bf16.msra.mxu0 %v686
    %772 = vmatprep.subr.bf16.mxu0 0
    %773 = vmatpush1.bf16.msra.mxu0 %v685
    %774 = vmatprep.subr.bf16.mxu0 0
    %775 = vmatpush1.bf16.msra.mxu0 %v684
    %776 = vmatprep.subr.bf16.mxu0 0
    %777 = vmatpush1.bf16.msra.mxu0 %v683
    %778 = vmatprep.subr.bf16.mxu0 0
    %779 = vmatpush1.bf16.msra.mxu0 %v682
    %780 = vmatprep.subr.bf16.mxu0 0
    %781 = vmatpush1.bf16.msra.mxu0 %v681
    %782 = vmatprep.subr.bf16.mxu0 0
    %783 = vmatpush1.bf16.msra.mxu0 %v680
    %784 = vmatprep.subr.bf16.mxu0 0
    %785 = vmatpush2.bf16.msra.mxu0 %v695
    %786 = vmatprep.subr.bf16.mxu0 0
    %787 = vmatpush2.bf16.msra.mxu0 %v694
    %788 = vmatprep.subr.bf16.mxu0 0
    %789 = vmatpush2.bf16.msra.mxu0 %v693
    %790 = vmatprep.subr.bf16.mxu0 0
    %791 = vmatpush2.bf16.msra.mxu0 %v692
    %792 = vmatprep.subr.bf16.mxu0 0
    %793 = vmatpush2.bf16.msra.mxu0 %v691
    %794 = vmatprep.subr.bf16.mxu0 0
    %795 = vmatpush2.bf16.msra.mxu0 %v690
    %796 = vmatprep.subr.bf16.mxu0 0
    %797 = vmatpush2.bf16.msra.mxu0 %v689
    %798 = vmatprep.subr.bf16.mxu0 0
    %799 = vmatpush2.bf16.msra.mxu0 %v688
    %800 = vmatprep.mubr.bf16.mxu0 %v531
    %801 = vmatmul.mubr.bf16.gmra.mxu0 %v530
    %v802 = vpop.f32.mrf.mxu0
    %v803 = vadd.f32 %v763, %v802
    %v804 = vpop.f32.mrf.mxu0
    %v805 = vpop.f32.mrf.mxu0
    %v806 = vpop.f32.mrf.mxu0
    %807 = vdwg.mxu0
    %vm808 = vcmask 58368
    %v809 = vsel %vm808, %v75, 0.0
    %810 = vadd.xlane.f32.xlu0 %v809
    %v811 = vpop.xlane.xlu0 %810
    %v812 = vmax.f32 %v811, 1e-09
    %v813 = vrcp.pop %v812
    %v814 = vlaneseq
    %v815 = vand.u32 %v814, 127
    %vm816 = vcmp.lt.s32.totalorder %v815, 32
    %v817 = vsel %vm816, 1.0, %v813
    %v818 = vmul.f32 %v803, %v817
    %v819 = vmul.f32 %v818, %v818
    %vm820 = vcmask 1041408
    %v821 = vsel %vm820, %v819, 0.0
    %822 = vadd.xlane.f32.xlu0 %v821
    %v823 = vpop.xlane.xlu0 %822
    %v824 = vmax.f32 %v823, 1e-24
    %v825 = vrsqrt.pop %v824
    %v826 = vmul.f32 %v818, %v825
    %827 = vst [vmem:[#allocation10] sm:$0x3] %v826
    // Predicated region
    $region38: #{tpu_custom_call.1} parent=1 // pred_check
      _
    $region39: #{tpu_custom_call.1} parent=1 // pred_check_branch
      %829 = sbr.rel (0) target = $region41
    $region40: #{tpu_custom_call.1} parent=1 // pred_region
      %s831 = ssub.s32 32, 32
      %832 = vsyncadd [#allocation4], %s831
      %s834 = sshll.u32 [#allocation10], 4
      %s835 = int_to_ptr.vmem [resolvable:$true] %s834
      %837 = dma.vmem_to_hbm [thread:$0]  %s835, 32, %s5, [#allocation4]
    $region41: #{tpu_custom_call.1} parent=1 // pred_fallthru
      _
    // Predicated region
    $region42: #{tpu_custom_call.1} parent=1 // pred_check
      _
    $region43: #{tpu_custom_call.1} parent=1 // pred_check_branch
      %839 = sbr.rel (0) target = $region45
    $region44: #{tpu_custom_call.1} parent=1 // pred_region
      %840 = dma.done [#allocation4], 32
    $region45: #{tpu_custom_call.1} parent=1 // pred_fallthru
      _
    %841 = vsyncpa [#allocation3], 1
    %842 = vsyncpa [#allocation6], 1
    %843 = vsyncpa [#allocation9], 1
    %844 = vsyncpa [#allocation4], 1

</llo_original>
